<compile_context>
chip_gen: v7x
topology: tpu7x:2x2x1
jax: 0.10.0
libtpu: 0.0.40
codegen_flags: <defaults>
</compile_context>

<pallas_src>
import functools

import numpy as np
import jax
import jax.numpy as jnp
from jax import lax
from jax.experimental import pallas as pl
from jax.experimental.pallas import tpu as pltpu


def _round_up(x, m):
    return ((x + m - 1) // m) * m


def _choose_tile_rows(n_rows, feat, tgt_itemsize, num_groups, use_mxu,
                      tile_rows_override=None):
    """Pick tile_rows by bytes (~2 MiB native tile) under a ~24 MiB VMEM cap."""
    if tile_rows_override is not None:
        t = max(32, (int(tile_rows_override) // 32) * 32)
        return min(t, _round_up(n_rows, 32))

    bytes_per_row_native = max(1, feat * tgt_itemsize)
    tile = (2 << 20) // bytes_per_row_native                 # ~2 MiB native tile

    # VMEM accounting per row: 2x double-buffered native input tile,
    # ~4 f32-tile-sized temporaries (cast / expanded / diff / iota),
    # plus the padded one-hot + iota intermediates on the MXU path.
    vmem_per_row = 2 * bytes_per_row_native + 4 * feat * 4
    if use_mxu:
        vmem_per_row += _round_up(num_groups, 128) * 8
    budget = 24 * 1024 * 1024
    tile = min(tile, budget // max(1, vmem_per_row))

    tile = min(tile, _round_up(n_rows, 32))
    tile = max(32, (tile // 32) * 32)
    return tile


def _all_mse_kernel_small_b(preds_ref, tgt_ref, out_ref, *,
                            n_rows, tile_rows, feat, offsets):
    """B <= 8: repeat_interleave via an unrolled select chain (no MXU)."""
    i = pl.program_id(0)
    # Lane-dense (TR, D) global-row index; avoids lane-sparse (TR, 1) temps.
    row = i * tile_rows + lax.broadcasted_iota(jnp.int32, (tile_rows, feat), 0)

    expanded = jnp.zeros((tile_rows, feat), jnp.float32)
    for b in range(len(offsets) - 1):
        start, end = offsets[b], offsets[b + 1]
        if end <= start:
            continue
        in_b = (row >= start) & (row < end)
        expanded = jnp.where(
            in_b, preds_ref[b:b + 1, :].astype(jnp.float32), expanded)

    diff = expanded - tgt_ref[...].astype(jnp.float32)
    # Unconditional ragged-tail mask: select (NOT multiply) so unspecified
    # padded target rows (possibly NaN/Inf) cannot contaminate the sum.
    diff = jnp.where(row < n_rows, diff, 0.0)
    out_ref[...] = jnp.sum(diff * diff, axis=0, keepdims=True)[None]   # (1,1,D)


def _all_mse_kernel_mxu(starts_ref, ends_ref, preds_ref, tgt_ref, out_ref, *,
                        n_rows, tile_rows, num_groups, feat, mxu_dtype):
    """B > 8: repeat_interleave as a one-hot (TR,B)x(B,D) MXU gather."""
    i = pl.program_id(0)

    row_b = i * tile_rows + lax.broadcasted_iota(
        jnp.int32, (tile_rows, num_groups), 0)
    starts = starts_ref[...]                                  # (1, B) int32
    ends = ends_ref[...]                                      # (1, B) int32
    onehot = ((row_b >= starts) & (row_b < ends)).astype(mxu_dtype)   # (TR, B)

    preds = preds_ref[...]
    if preds.dtype != mxu_dtype:
        preds = preds.astype(mxu_dtype)
    expanded = jnp.dot(onehot, preds,
                       preferred_element_type=jnp.float32)    # (TR, D) f32

    diff = expanded - tgt_ref[...].astype(jnp.float32)
    row_d = i * tile_rows + lax.broadcasted_iota(jnp.int32, (tile_rows, feat), 0)
    diff = jnp.where(row_d < n_rows, diff, 0.0)
    out_ref[...] = jnp.sum(diff * diff, axis=0, keepdims=True)[None]   # (1,1,D)


def all_mse_loss(preds, targets, lengths, *, tile_rows=None, small_b_max=8):
    """Pallas equivalent of AllMseLoss.forward(preds, targets, lengths)."""
    B, D = preds.shape
    lengths_np = np.asarray(lengths, dtype=np.int64)
    N = int(lengths_np.sum())
    assert targets.shape == (N, D), "Not equal shape"

    offsets = np.concatenate(
        [np.zeros(1, dtype=np.int64), np.cumsum(lengths_np)]).astype(np.int32)

    use_mxu = B > small_b_max
    tr = _choose_tile_rows(N, D, targets.dtype.itemsize, B, use_mxu, tile_rows)
    num_blocks = pl.cdiv(N, tr)

    tgt_spec = pl.BlockSpec((tr, D), lambda i: (i, 0))          # streamed
    preds_spec = pl.BlockSpec((B, D), lambda i: (0, 0))         # resident
    out_spec = pl.BlockSpec((1, 1, D), lambda i: (i, 0, 0))     # lane-dense partial

    if use_mxu:
        mxu_dtype = jnp.bfloat16 if preds.dtype == jnp.bfloat16 else jnp.float32
        kernel = functools.partial(
            _all_mse_kernel_mxu, n_rows=N, tile_rows=tr,
            num_groups=B, feat=D, mxu_dtype=mxu_dtype)
        starts = jnp.asarray(offsets[:B].reshape(1, B))
        ends = jnp.asarray(offsets[1:].reshape(1, B))
        in_specs = [pl.BlockSpec((1, B), lambda i: (0, 0)),     # starts (resident)
                    pl.BlockSpec((1, B), lambda i: (0, 0)),     # ends   (resident)
                    preds_spec, tgt_spec]
        args = (starts, ends, preds, targets)
        flops = 2 * N * B * D + 4 * N * D
        extra_bytes = 2 * B * 4
    else:
        kernel = functools.partial(
            _all_mse_kernel_small_b, n_rows=N, tile_rows=tr, feat=D,
            offsets=tuple(int(o) for o in offsets))
        in_specs = [preds_spec, tgt_spec]
        args = (preds, targets)
        flops = (2 * B + 4) * N * D
        extra_bytes = 0

    cost = pl.CostEstimate(
        flops=flops,
        transcendentals=0,
        bytes_accessed=(N * D * targets.dtype.itemsize
                        + B * D * preds.dtype.itemsize
                        + num_blocks * D * 4
                        + extra_bytes),
    )

    partials = pl.pallas_call(
        kernel,
        out_shape=jax.ShapeDtypeStruct((num_blocks, 1, D), jnp.float32),
        grid_spec=pltpu.PrefetchScalarGridSpec(
            num_scalar_prefetch=0,
            grid=(num_blocks,),
            in_specs=in_specs,
            out_specs=out_spec,
        ),
        compiler_params=pltpu.CompilerParams(
            dimension_semantics=("parallel",),
            vmem_limit_bytes=32 * 1024 * 1024),
        cost_estimate=cost,
    )(*args)

    # Tiny epilogue: sum the per-block lane-dense partials and normalize.
    # Fold 1/(N*D) in f64 on host so the denominator itself does not round.
    inv_denom = 1.0 / (float(N) * float(D))
    return jnp.sum(partials) * jnp.float32(inv_denom)


if __name__ == "__main__":
    key = jax.random.PRNGKey(0)

    def reference(preds, targets, lengths):
        preds_rep = jnp.asarray(
            np.repeat(np.asarray(preds), np.asarray(lengths), axis=0))
        return jnp.mean((preds_rep - targets) ** 2)

    # --- Test 1: small-B select-chain path, single block, ragged tail. ---
    k1, k2, key = jax.random.split(key, 3)
    B, D = 4, 32
    lengths = [3, 2, 2, 4]                       # N = 11
    N = sum(lengths)
    preds = jax.random.normal(k1, (B, D), dtype=jnp.float32)
    targets = jax.random.normal(k2, (N, D), dtype=jnp.float32)
    loss = jax.block_until_ready(all_mse_loss(preds, targets, lengths))
    ref = reference(preds, targets, lengths)
    assert np.allclose(np.asarray(loss), np.asarray(ref),
                       rtol=1e-5, atol=1e-6), (float(loss), float(ref))

    # --- Test 2: small-B path, multi-block grid (forced tile), masked tail. ---
    k1, k2, key = jax.random.split(key, 3)
    lengths2 = [10, 9, 8, 12]                    # N = 39 -> 2 blocks at tile 32
    N2 = sum(lengths2)
    preds2 = jax.random.normal(k1, (B, D), dtype=jnp.float32)
    targets2 = jax.random.normal(k2, (N2, D), dtype=jnp.float32)
    loss2 = jax.block_until_ready(
        all_mse_loss(preds2, targets2, lengths2, tile_rows=32))
    ref2 = reference(preds2, targets2, lengths2)
    assert np.allclose(np.asarray(loss2), np.asarray(ref2),
                       rtol=1e-5, atol=1e-6), (float(loss2), float(ref2))

    # --- Test 3: larger-B MXU one-hot gather path. ---
    k1, k2, key = jax.random.split(key, 3)
    B3 = 16
    lengths3 = [1 + (i % 5) for i in range(B3)]  # N = 46
    N3 = sum(lengths3)
    preds3 = jax.random.normal(k1, (B3, D), dtype=jnp.float32)
    targets3 = jax.random.normal(k2, (N3, D), dtype=jnp.float32)
    loss3 = jax.block_until_ready(all_mse_loss(preds3, targets3, lengths3))
    ref3 = reference(preds3, targets3, lengths3)
    assert np.allclose(np.asarray(loss3), np.asarray(ref3),
                       rtol=1e-5, atol=1e-6), (float(loss3), float(ref3))

    print("KERNEL_OK")
</pallas_src>

<mosaic_0001>
module attributes {stable_mosaic.version = 11 : i64} {
  func.func @_all_mse_kernel_small_b(%arg0: i32, %arg1: memref<4x32xf32, #tpu.memory_space<vmem>>, %arg2: memref<32x32xf32, #tpu.memory_space<vmem>>, %arg3: memref<1x1x32xf32, #tpu.memory_space<vmem>>) attributes {dimension_semantics = [#tpu.dimension_semantics<parallel>], iteration_bounds = array<i64: 1>, scalar_prefetch = 0 : i64, scratch_operands = 0 : i64, tpu.core_type = #tpu.core_type<tc>, window_params = [{pipeline_mode = #tpu.pipeline_mode<synchronous>, transform_indices = @transform_0, window_bounds = array<i64: 4, 32>}, {transform_indices = @transform_1, window_bounds = array<i64: 32, 32>}, {transform_indices = @transform_2, window_bounds = array<i64: 1, 1, 32>}]} {
    %c32_i32 = arith.constant 32 : i32
    %0 = arith.muli %arg0, %c32_i32 : i32
    %1 = tpu.iota {dimensions = array<i32: 0>} : vector<32x32xi32>
    %2 = vector.broadcast %0 : i32 to vector<32x32xi32>
    %3 = arith.addi %2, %1 : vector<32x32xi32>
    %cst = arith.constant 0.000000e+00 : f32
    %4 = vector.broadcast %cst : f32 to vector<32x32xf32>
    %c0_i32 = arith.constant 0 : i32
    %5 = vector.broadcast %c0_i32 : i32 to vector<32x32xi32>
    %6 = arith.cmpi sge, %3, %5 : vector<32x32xi32>
    %c3_i32 = arith.constant 3 : i32
    %7 = vector.broadcast %c3_i32 : i32 to vector<32x32xi32>
    %8 = arith.cmpi slt, %3, %7 : vector<32x32xi32>
    %9 = arith.andi %6, %8 : vector<32x32xi1>
    %c0 = arith.constant 0 : index
    %c0_0 = arith.constant 0 : index
    %10 = vector.load %arg1[%c0, %c0_0] : memref<4x32xf32, #tpu.memory_space<vmem>>, vector<1x32xf32>
    %11 = vector.shape_cast %10 : vector<1x32xf32> to vector<1x32xf32>
    %12 = vector.broadcast %11 : vector<1x32xf32> to vector<32x32xf32>
    %13 = arith.select %9, %12, %4 : vector<32x32xi1>, vector<32x32xf32>
    %c3_i32_1 = arith.constant 3 : i32
    %14 = vector.broadcast %c3_i32_1 : i32 to vector<32x32xi32>
    %15 = arith.cmpi sge, %3, %14 : vector<32x32xi32>
    %c5_i32 = arith.constant 5 : i32
    %16 = vector.broadcast %c5_i32 : i32 to vector<32x32xi32>
    %17 = arith.cmpi slt, %3, %16 : vector<32x32xi32>
    %18 = arith.andi %15, %17 : vector<32x32xi1>
    %c1 = arith.constant 1 : index
    %c0_2 = arith.constant 0 : index
    %19 = vector.load %arg1[%c1, %c0_2] : memref<4x32xf32, #tpu.memory_space<vmem>>, vector<1x32xf32>
    %20 = vector.shape_cast %19 : vector<1x32xf32> to vector<1x32xf32>
    %21 = vector.broadcast %20 : vector<1x32xf32> to vector<32x32xf32>
    %22 = arith.select %18, %21, %13 : vector<32x32xi1>, vector<32x32xf32>
    %c5_i32_3 = arith.constant 5 : i32
    %23 = vector.broadcast %c5_i32_3 : i32 to vector<32x32xi32>
    %24 = arith.cmpi sge, %3, %23 : vector<32x32xi32>
    %c7_i32 = arith.constant 7 : i32
    %25 = vector.broadcast %c7_i32 : i32 to vector<32x32xi32>
    %26 = arith.cmpi slt, %3, %25 : vector<32x32xi32>
    %27 = arith.andi %24, %26 : vector<32x32xi1>
    %c2 = arith.constant 2 : index
    %c0_4 = arith.constant 0 : index
    %28 = vector.load %arg1[%c2, %c0_4] : memref<4x32xf32, #tpu.memory_space<vmem>>, vector<1x32xf32>
    %29 = vector.shape_cast %28 : vector<1x32xf32> to vector<1x32xf32>
    %30 = vector.broadcast %29 : vector<1x32xf32> to vector<32x32xf32>
    %31 = arith.select %27, %30, %22 : vector<32x32xi1>, vector<32x32xf32>
    %c7_i32_5 = arith.constant 7 : i32
    %32 = vector.broadcast %c7_i32_5 : i32 to vector<32x32xi32>
    %33 = arith.cmpi sge, %3, %32 : vector<32x32xi32>
    %c11_i32 = arith.constant 11 : i32
    %34 = vector.broadcast %c11_i32 : i32 to vector<32x32xi32>
    %35 = arith.cmpi slt, %3, %34 : vector<32x32xi32>
    %36 = arith.andi %33, %35 : vector<32x32xi1>
    %c3 = arith.constant 3 : index
    %c0_6 = arith.constant 0 : index
    %37 = vector.load %arg1[%c3, %c0_6] : memref<4x32xf32, #tpu.memory_space<vmem>>, vector<1x32xf32>
    %38 = vector.shape_cast %37 : vector<1x32xf32> to vector<1x32xf32>
    %39 = vector.broadcast %38 : vector<1x32xf32> to vector<32x32xf32>
    %40 = arith.select %36, %39, %31 : vector<32x32xi1>, vector<32x32xf32>
    %c0_7 = arith.constant 0 : index
    %c0_8 = arith.constant 0 : index
    %41 = vector.load %arg2[%c0_7, %c0_8] : memref<32x32xf32, #tpu.memory_space<vmem>>, vector<32x32xf32>
    %42 = arith.subf %40, %41 : vector<32x32xf32>
    %c11_i32_9 = arith.constant 11 : i32
    %43 = vector.broadcast %c11_i32_9 : i32 to vector<32x32xi32>
    %44 = arith.cmpi slt, %3, %43 : vector<32x32xi32>
    %cst_10 = arith.constant 0.000000e+00 : f32
    %45 = vector.broadcast %cst_10 : f32 to vector<32x32xf32>
    %46 = arith.select %44, %42, %45 : vector<32x32xi1>, vector<32x32xf32>
    %47 = arith.mulf %46, %46 : vector<32x32xf32>
    %cst_11 = arith.constant dense<0.000000e+00> : vector<32xf32>
    %48 = vector.multi_reduction <add>, %47, %cst_11 [0] : vector<32x32xf32> to vector<32xf32>
    %49 = vector.shape_cast %48 : vector<32xf32> to vector<1x32xf32>
    %50 = vector.shape_cast %49 : vector<1x32xf32> to vector<1x1x32xf32>
    %c0_12 = arith.constant 0 : index
    %c0_13 = arith.constant 0 : index
    %c0_14 = arith.constant 0 : index
    %51 = vector.load %arg3[%c0_12, %c0_13, %c0_14] : memref<1x1x32xf32, #tpu.memory_space<vmem>>, vector<1x1x32xf32>
    tpu.vector_store %arg3[%c0_12, %c0_13, %c0_14], %50 {strides = array<i32>} : memref<1x1x32xf32, #tpu.memory_space<vmem>>, vector<1x1x32xf32>,
    return
  }
  func.func @transform_0(%arg0: i32) -> (i32, i32) {
    %c0_i32 = arith.constant 0 : i32
    %c0_i32_0 = arith.constant 0 : i32
    %c0_i32_1 = arith.constant 0 : i32
    return %c0_i32, %c0_i32_0 : i32, i32
  }
  func.func @transform_1(%arg0: i32) -> (i32, i32) {
    %c0_i32 = arith.constant 0 : i32
    %c0_i32_0 = arith.constant 0 : i32
    return %arg0, %c0_i32 : i32, i32
  }
  func.func @transform_2(%arg0: i32) -> (i32, i32, i32) {
    %c0_i32 = arith.constant 0 : i32
    %c0_i32_0 = arith.constant 0 : i32
    %c0_i32_1 = arith.constant 0 : i32
    return %arg0, %c0_i32, %c0_i32_0 : i32, i32, i32
  }
}

</mosaic_0001>

<llo_original>
// kernel: tpu_custom_call.1
$region0: #{tpu_custom_call.1}
  #allocation0 [shape = 'u32[]', space=smem, size = 0x4, offset = 0x4, fixed_abs, tag = 'smem constant byte address 0x4 - core index']
  #allocation1 [shape = 'u32[144,128]{1,0:T(1,128)}', space=vmem, size = 0x12000, scoped, tag = 'internal scratch']
  %s0 = inlined_call_operand.hbm [shape: f32[4,32], index: 0, kind: input, shape index: {}]
  %s1 = inlined_call_operand.hbm [shape: f32[11,32], index: 1, kind: input, shape index: {}]
  %s2 = inlined_call_operand.hbm [shape: f32[1,1,32], index: 2, kind: output, shape index: {}]
  %s3 = sld [smem:[#allocation0]]
  $region26: #{tpu_custom_call.1} parent=0
    _
  %s5 = ssub.s32 1, %s3
  %s6 = scalar_select 0, %s5, %s3
  $region1: #{tpu_custom_call.1} parent=0
    #allocation2 [shape = 'u8[2048]{0}', space=vmem, size = 0x800, scoped, tag = 'input window, operand 0, single buffered']
    #allocation3 [shape = 's32[1]{0}', space=sflag, size = 0x4, scoped, tag = 'scoped memory for tpu_custom_call.1']
    #allocation4 [shape = 's32[1]{0}', space=sflag, size = 0x4, scoped, tag = 'scoped memory for tpu_custom_call.1']
    #allocation5 [shape = 'u8[16384]{0}', space=vmem, size = 0x4000, scoped, tag = 'input window, operand 1, single buffered']
    #allocation6 [shape = 's32[1]{0}', space=sflag, size = 0x4, scoped, tag = 'scoped memory for tpu_custom_call.1']
    #allocation7 [shape = 'u8[512]{0}', space=vmem, size = 0x400, scoped, tag = 'output window, operand 0, single buffered']
    %7 = vsyncpa [#allocation3], 0
    %8 = vsyncpa [#allocation6], 0
    %9 = vsyncpa [#allocation4], 0
    // Predicated region
    $region2: #{tpu_custom_call.1} parent=1 // pred_check
      _
    $region3: #{tpu_custom_call.1} parent=1 // pred_check_branch
      %11 = sbr.rel (0) target = $region5
    $region4: #{tpu_custom_call.1} parent=1 // pred_region
      %s13 = ssub.s32 64, 64
      %14 = vsyncadd [#allocation3], %s13
      %s16 = sshll.u32 [#allocation2], 4
      %s17 = int_to_ptr.vmem [resolvable:$true] %s16
      %19 = dma.hbm_to_vmem [thread:$0]  %s0, 64, %s17, [#allocation3]
    $region5: #{tpu_custom_call.1} parent=1 // pred_fallthru
      _
    // Predicated region
    $region6: #{tpu_custom_call.1} parent=1 // pred_check
      _
    $region7: #{tpu_custom_call.1} parent=1 // pred_check_branch
      %21 = sbr.rel (0) target = $region9
    $region8: #{tpu_custom_call.1} parent=1 // pred_region
      %s23 = ssub.s32 512, 256
      %24 = vsyncadd [#allocation6], %s23
      %s25 = sshll.u32 [#allocation5], 4
      %s26 = int_to_ptr.vmem [resolvable:$true] %s25
      %31 = dma.hbm_to_vmem [thread:$0]  %s1, 256, %s26, [#allocation6], 128, 128, 8
    $region9: #{tpu_custom_call.1} parent=1 // pred_fallthru
      _
    // Predicated region
    $region10: #{tpu_custom_call.1} parent=1 // pred_check
      _
    $region11: #{tpu_custom_call.1} parent=1 // pred_check_branch
      %33 = sbr.rel (0) target = $region13
    $region12: #{tpu_custom_call.1} parent=1 // pred_region
      %34 = dma.done [#allocation3], 64
    $region13: #{tpu_custom_call.1} parent=1 // pred_fallthru
      _
    // Predicated region
    $region14: #{tpu_custom_call.1} parent=1 // pred_check
      _
    $region15: #{tpu_custom_call.1} parent=1 // pred_check_branch
      %36 = sbr.rel (0) target = $region17
    $region16: #{tpu_custom_call.1} parent=1 // pred_region
      %37 = dma.done [#allocation6], 512
    $region17: #{tpu_custom_call.1} parent=1 // pred_fallthru
      _
    %s38 = smul.u32 0, 32
    %v39 = vlaneseq
    %v40 = vshrl.u32 %v39, 7
    %v41 = vadd.s32 %v40, 8
    %v42 = vadd.s32 %v40, 16
    %v43 = vadd.s32 %v40, 24
    %v44 = vstv %s38
    %v45 = vadd.s32 %v44, %v40
    %v46 = vadd.s32 %v44, %v41
    %v47 = vadd.s32 %v44, %v42
    %v48 = vadd.s32 %v44, %v43
    %vm49 = vcmp.ge.s32.totalorder %v45, 0
    %vm50 = vcmp.ge.s32.totalorder %v46, 0
    %vm51 = vcmp.ge.s32.totalorder %v47, 0
    %vm52 = vcmp.ge.s32.totalorder %v48, 0
    %vm53 = vcmp.lt.s32.totalorder %v45, 3
    %vm54 = vcmp.lt.s32.totalorder %v46, 3
    %vm55 = vcmp.lt.s32.totalorder %v47, 3
    %vm56 = vcmp.lt.s32.totalorder %v48, 3
    %vm57 = vmand %vm49, %vm53
    %vm58 = vmand %vm50, %vm54
    %vm59 = vmand %vm51, %vm55
    %vm60 = vmand %vm52, %vm56
    %v61 = vld [vmem:[#allocation2] sm:$0x1]
    %v62 = vlaneseq
    %v63 = vshrl.u32 %v62, 7
    %v64 = vsub.s32 0, %v63
    %v65 = vrot.slane %v61, %v64
    %v66 = vsel %vm57, %v65, 0.0
    %v67 = vsel %vm58, %v65, 0.0
    %v68 = vsel %vm59, %v65, 0.0
    %v69 = vsel %vm60, %v65, 0.0
    %vm70 = vcmp.ge.s32.totalorder %v45, 3
    %vm71 = vcmp.ge.s32.totalorder %v46, 3
    %vm72 = vcmp.ge.s32.totalorder %v47, 3
    %vm73 = vcmp.ge.s32.totalorder %v48, 3
    %vm74 = vcmp.lt.s32.totalorder %v45, 5
    %vm75 = vcmp.lt.s32.totalorder %v46, 5
    %vm76 = vcmp.lt.s32.totalorder %v47, 5
    %vm77 = vcmp.lt.s32.totalorder %v48, 5
    %vm78 = vmand %vm70, %vm74
    %vm79 = vmand %vm71, %vm75
    %vm80 = vmand %vm72, %vm76
    %vm81 = vmand %vm73, %vm77
    %v82 = vld [vmem:[#allocation2 + $0x1] sm:$0x1]
    %v83 = vlaneseq
    %v84 = vshrl.u32 %v83, 7
    %v85 = vsub.s32 0, %v84
    %v86 = vrot.slane %v82, %v85
    %v87 = vsel %vm78, %v86, %v66
    %v88 = vsel %vm79, %v86, %v67
    %v89 = vsel %vm80, %v86, %v68
    %v90 = vsel %vm81, %v86, %v69
    %vm91 = vcmp.ge.s32.totalorder %v45, 5
    %vm92 = vcmp.ge.s32.totalorder %v46, 5
    %vm93 = vcmp.ge.s32.totalorder %v47, 5
    %vm94 = vcmp.ge.s32.totalorder %v48, 5
    %vm95 = vcmp.lt.s32.totalorder %v45, 7
    %vm96 = vcmp.lt.s32.totalorder %v46, 7
    %vm97 = vcmp.lt.s32.totalorder %v47, 7
    %vm98 = vcmp.lt.s32.totalorder %v48, 7
    %vm99 = vmand %vm91, %vm95
    %vm100 = vmand %vm92, %vm96
    %vm101 = vmand %vm93, %vm97
    %vm102 = vmand %vm94, %vm98
    %v103 = vld [vmem:[#allocation2 + $0x2] sm:$0x1]
    %v104 = vlaneseq
    %v105 = vshrl.u32 %v104, 7
    %v106 = vsub.s32 0, %v105
    %v107 = vrot.slane %v103, %v106
    %v108 = vsel %vm99, %v107, %v87
    %v109 = vsel %vm100, %v107, %v88
    %v110 = vsel %vm101, %v107, %v89
    %v111 = vsel %vm102, %v107, %v90
    %vm112 = vcmp.ge.s32.totalorder %v45, 7
    %vm113 = vcmp.ge.s32.totalorder %v46, 7
    %vm114 = vcmp.ge.s32.totalorder %v47, 7
    %vm115 = vcmp.ge.s32.totalorder %v48, 7
    %vm116 = vcmp.lt.s32.totalorder %v45, 11
    %vm117 = vcmp.lt.s32.totalorder %v46, 11
    %vm118 = vcmp.lt.s32.totalorder %v47, 11
    %vm119 = vcmp.lt.s32.totalorder %v48, 11
    %vm120 = vmand %vm112, %vm116
    %vm121 = vmand %vm113, %vm117
    %vm122 = vmand %vm114, %vm118
    %vm123 = vmand %vm115, %vm119
    %v124 = vld [vmem:[#allocation2 + $0x3] sm:$0x1]
    %v125 = vlaneseq
    %v126 = vshrl.u32 %v125, 7
    %v127 = vsub.s32 0, %v126
    %v128 = vrot.slane %v124, %v127
    %v129 = vsel %vm120, %v128, %v108
    %v130 = vsel %vm121, %v128, %v109
    %v131 = vsel %vm122, %v128, %v110
    %v132 = vsel %vm123, %v128, %v111
    %v133 = vld [vmem:[#allocation5] sm:$0xff]
    %v134 = vld [vmem:[#allocation5 + $0x8] sm:$0xff]
    %v135 = vld [vmem:[#allocation5 + $0x10] sm:$0xff]
    %v136 = vld [vmem:[#allocation5 + $0x18] sm:$0xff]
    %v137 = vsub.f32 %v129, %v133
    %v138 = vsub.f32 %v130, %v134
    %v139 = vsub.f32 %v131, %v135
    %v140 = vsub.f32 %v132, %v136
    %v141 = vsel %vm116, %v137, 0.0
    %v142 = vsel %vm117, %v138, 0.0
    %v143 = vsel %vm118, %v139, 0.0
    %v144 = vsel %vm119, %v140, 0.0
    %v145 = vmul.f32 %v141, %v141
    %v146 = vmul.f32 %v142, %v142
    %v147 = vmul.f32 %v143, %v143
    %v148 = vmul.f32 %v144, %v144
    %vm149 = vcmask 261120
    %v150 = vsel %vm149, %v145, 0.0
    %v151 = vsel %vm149, %v146, 0.0
    %v152 = vadd.f32 %v150, %v151
    %v153 = vsel %vm149, %v147, 0.0
    %v154 = vadd.f32 %v152, %v153
    %v155 = vsel %vm149, %v148, 0.0
    %v156 = vadd.f32 %v154, %v155
    %v157 = vrot.slane %v156, 4
    %v158 = vadd.f32 %v156, %v157
    %v159 = vrot.slane %v158, 2
    %v160 = vadd.f32 %v158, %v159
    %v161 = vrot.slane %v160, 1
    %v162 = vadd.f32 %v160, %v161
    %vm163 = vcmask 253952
    %164 = vst.msk [vmem:[#allocation7] sm:$0x1] %vm163, %v162
    // Predicated region
    $region18: #{tpu_custom_call.1} parent=1 // pred_check
      _
    $region19: #{tpu_custom_call.1} parent=1 // pred_check_branch
      %166 = sbr.rel (0) target = $region21
    $region20: #{tpu_custom_call.1} parent=1 // pred_region
      %s168 = ssub.s32 16, 16
      %169 = vsyncadd [#allocation4], %s168
      %s171 = sshll.u32 [#allocation7], 4
      %s172 = int_to_ptr.vmem [resolvable:$true] %s171
      %174 = dma.vmem_to_hbm [thread:$0]  %s172, 16, %s2, [#allocation4]
    $region21: #{tpu_custom_call.1} parent=1 // pred_fallthru
      _
    // Predicated region
    $region22: #{tpu_custom_call.1} parent=1 // pred_check
      _
    $region23: #{tpu_custom_call.1} parent=1 // pred_check_branch
      %176 = sbr.rel (0) target = $region25
    $region24: #{tpu_custom_call.1} parent=1 // pred_region
      %177 = dma.done [#allocation4], 16
    $region25: #{tpu_custom_call.1} parent=1 // pred_fallthru
      _
    %178 = vsyncpa [#allocation3], 1
    %179 = vsyncpa [#allocation6], 1
    %180 = vsyncpa [#allocation4], 1

</llo_original>
